<compile_context>
chip_gen: v5e
topology: v5e:2x2
jax: 0.10.0
libtpu: 0.0.40
codegen_flags: <defaults>
</compile_context>

<pallas_src>
import math

import jax
import jax.numpy as jnp
from jax import lax
from jax.experimental import pallas as pl
from jax.experimental.pallas import tpu as pltpu

NEG_SLOPE = 0.01  # torch.nn.LeakyReLU default


def _leaky_relu(x):
    return jnp.where(x > 0, x, NEG_SLOPE * x)


def critic_kernel(obs_ref, act_ref, w1o_ref, w1a_ref, b1_ref, w2_ref, b2_ref,
                  w3t_ref, b3t_ref, o_ref):
    obs = obs_ref[...]                      # (TB, obs_size)
    act = act_ref[...]                      # (TB, act_size)

    # Layer 1: obs part on the MXU, action part as rank-1 broadcast updates
    # (act_size is a tiny static constant, so the Python loop fully unrolls).
    h1 = jnp.dot(obs, w1o_ref[...], preferred_element_type=jnp.float32)
    for a in range(act.shape[-1]):
        h1 = h1 + act[:, a:a + 1] * w1a_ref[a:a + 1, :]
    h1 = _leaky_relu(h1 + b1_ref[...])

    # Layer 2.
    h2 = _leaky_relu(
        jnp.dot(h1, w2_ref[...], preferred_element_type=jnp.float32) + b2_ref[...]
    )

    # Layer 3, computed transposed so the store is lane-dense:
    #   (out_size, W) . (TB, W)^T -> (out_size, TB)   (batch on the lane axis)
    out_t = lax.dot_general(
        w3t_ref[...], h2,
        dimension_numbers=(((1,), (1,)), ((), ())),
        preferred_element_type=jnp.float32,
    )
    o_ref[...] = (out_t + b3t_ref[...]).astype(o_ref.dtype)


def _round_up(x, m):
    return (x + m - 1) // m * m


def _choose_batch_tile(batch, requested):
    """Pick (tile_rows, num_tiles).  Multi-tile tiles are multiples of 128 so the
    transposed (out, TB) output block is lane-dense; a single tile just rounds
    the batch up to a sublane multiple."""
    tb = 1024 if requested is None else int(requested)
    if batch <= tb:
        return max(_round_up(batch, 8), 8), 1
    tb = max(128, (tb // 128) * 128)
    return tb, pl.cdiv(batch, tb)


def critic_forward(obs, action, params, *, block_batch=None):
    """obs: (B, obs_size), action: (B, act_size) -> (B, output_size)."""
    w1o, w1a, b1, w2, b2, w3t, b3t = params
    obs = obs.astype(jnp.float32)
    action = action.astype(jnp.float32)

    batch = obs.shape[0]
    obs_size = obs.shape[1]
    act_size = action.shape[1]
    width = w2.shape[0]
    out_size = w3t.shape[0]

    tb, num_tiles = _choose_batch_tile(batch, block_batch)
    b_pad = tb * num_tiles
    if b_pad != batch:  # pad the tail tile with zero rows (sliced off below)
        obs = jnp.pad(obs, ((0, b_pad - batch), (0, 0)))
        action = jnp.pad(action, ((0, b_pad - batch), (0, 0)))

    def row_spec(feat):
        return pl.BlockSpec((tb, feat), lambda i: (i, 0))

    def const_spec(shape):
        return pl.BlockSpec(shape, lambda i: (0, 0))

    out_t = pl.pallas_call(
        critic_kernel,
        out_shape=jax.ShapeDtypeStruct((out_size, b_pad), jnp.float32),
        grid=(num_tiles,),
        in_specs=[
            row_spec(obs_size),             # obs      (tiled over batch)
            row_spec(act_size),             # action   (tiled over batch)
            const_spec((obs_size, width)),  # W1[:obs] (VMEM-resident, DMA'd once)
            const_spec((act_size, width)),  # W1[obs:]
            const_spec((1, width)),         # b1
            const_spec((width, width)),     # W2
            const_spec((1, width)),         # b2
            const_spec((out_size, width)),  # W3^T
            const_spec((out_size, 1)),      # b3 (column)
        ],
        out_specs=pl.BlockSpec((out_size, tb), lambda i: (0, i)),
        compiler_params=pltpu.CompilerParams(
            dimension_semantics=("parallel",),
        ),
    )(obs, action, w1o, w1a, b1, w2, b2, w3t, b3t)

    # (out_size, B_pad) -> (B, out_size); for out_size == 1 this is a free reshape.
    return out_t[:, :batch].T


def init_critic_params(key, net_width=32, obs_size=4, act_size=1, output_size=1):
    """torch.nn.Linear-style init (uniform +/- 1/sqrt(fan_in)), stored kernel-ready."""
    k1, k2, k3 = jax.random.split(key, 3)

    def linear(k, fan_in, fan_out):
        kw, kb = jax.random.split(k)
        bound = 1.0 / math.sqrt(fan_in)
        w = jax.random.uniform(kw, (fan_in, fan_out), jnp.float32, -bound, bound)
        b = jax.random.uniform(kb, (1, fan_out), jnp.float32, -bound, bound)
        return w, b

    w1, b1 = linear(k1, obs_size + act_size, net_width)
    w2, b2 = linear(k2, net_width, net_width)
    w3, b3 = linear(k3, net_width, output_size)
    return (
        w1[:obs_size],   # (obs_size, W)
        w1[obs_size:],   # (act_size, W)
        b1,              # (1, W)
        w2,              # (W, W)
        b2,              # (1, W)
        w3.T,            # (output_size, W)  -- final layer runs transposed in-kernel
        b3.T,            # (output_size, 1)
    )


def reference_forward(obs, action, params):
    w1o, w1a, b1, w2, b2, w3t, b3t = params
    x = obs.astype(jnp.float32) @ w1o + action.astype(jnp.float32) @ w1a + b1
    h1 = _leaky_relu(x)
    h2 = _leaky_relu(h1 @ w2 + b2)
    return h2 @ w3t.T + b3t.T


if __name__ == "__main__":
    net_width, obs_size, act_size, output_size = 32, 4, 1, 1

    key = jax.random.PRNGKey(0)
    k_params, k_data = jax.random.split(key)
    params = init_critic_params(k_params, net_width, obs_size, act_size, output_size)

    # (batch, batch-tile): tiny single-tile case + multi-tile grid with tail padding.
    for batch, tb in ((8, None), (300, 128)):
        k_data, k_obs, k_act = jax.random.split(k_data, 3)
        obs = jax.random.normal(k_obs, (batch, obs_size), jnp.float32)
        action = jax.random.normal(k_act, (batch, act_size), jnp.float32)

        out = critic_forward(obs, action, params, block_batch=tb)
        out = jax.block_until_ready(out)

        ref = reference_forward(obs, action, params)
        assert out.shape == (batch, output_size), out.shape
        assert jnp.allclose(out, ref, atol=1e-5, rtol=1e-5), f"mismatch (batch={batch})"

    print("KERNEL_OK")
</pallas_src>

<mosaic_0001>
module attributes {stable_mosaic.version = 11 : i64} {
  func.func @critic_kernel(%arg0: i32, %arg1: memref<8x4xf32, #tpu.memory_space<vmem>>, %arg2: memref<8x1xf32, #tpu.memory_space<vmem>>, %arg3: memref<4x32xf32, #tpu.memory_space<vmem>>, %arg4: memref<1x32xf32, #tpu.memory_space<vmem>>, %arg5: memref<1x32xf32, #tpu.memory_space<vmem>>, %arg6: memref<32x32xf32, #tpu.memory_space<vmem>>, %arg7: memref<1x32xf32, #tpu.memory_space<vmem>>, %arg8: memref<1x32xf32, #tpu.memory_space<vmem>>, %arg9: memref<1x1xf32, #tpu.memory_space<vmem>>, %arg10: memref<1x8xf32, #tpu.memory_space<vmem>>) attributes {dimension_semantics = [#tpu.dimension_semantics<parallel>], iteration_bounds = array<i64: 1>, scalar_prefetch = 0 : i64, scratch_operands = 0 : i64, tpu.core_type = #tpu.core_type<tc>, window_params = [{transform_indices = @transform_0, window_bounds = array<i64: 8, 4>}, {transform_indices = @transform_1, window_bounds = array<i64: 8, 1>}, {pipeline_mode = #tpu.pipeline_mode<synchronous>, transform_indices = @transform_2, window_bounds = array<i64: 4, 32>}, {pipeline_mode = #tpu.pipeline_mode<synchronous>, transform_indices = @transform_3, window_bounds = array<i64: 1, 32>}, {pipeline_mode = #tpu.pipeline_mode<synchronous>, transform_indices = @transform_4, window_bounds = array<i64: 1, 32>}, {pipeline_mode = #tpu.pipeline_mode<synchronous>, transform_indices = @transform_5, window_bounds = array<i64: 32, 32>}, {pipeline_mode = #tpu.pipeline_mode<synchronous>, transform_indices = @transform_6, window_bounds = array<i64: 1, 32>}, {pipeline_mode = #tpu.pipeline_mode<synchronous>, transform_indices = @transform_7, window_bounds = array<i64: 1, 32>}, {pipeline_mode = #tpu.pipeline_mode<synchronous>, transform_indices = @transform_8, window_bounds = array<i64: 1, 1>}, {transform_indices = @transform_9, window_bounds = array<i64: 1, 8>}]} {
    %c0 = arith.constant 0 : index
    %c0_0 = arith.constant 0 : index
    %0 = vector.load %arg1[%c0, %c0_0] : memref<8x4xf32, #tpu.memory_space<vmem>>, vector<8x4xf32>
    %c0_1 = arith.constant 0 : index
    %c0_2 = arith.constant 0 : index
    %1 = vector.load %arg2[%c0_1, %c0_2] : memref<8x1xf32, #tpu.memory_space<vmem>>, vector<8x1xf32>
    %c0_3 = arith.constant 0 : index
    %c0_4 = arith.constant 0 : index
    %2 = vector.load %arg3[%c0_3, %c0_4] : memref<4x32xf32, #tpu.memory_space<vmem>>, vector<4x32xf32>
    %cst = arith.constant dense<0.000000e+00> : vector<8x32xf32>
    %3 = tpu.matmul %0, %2, %cst {dimension_numbers = #tpu.dot_dimension_numbers<[1], [0], [0], [1], [0, 0, 1, 1], [], []>} : vector<8x4xf32>, vector<4x32xf32>, vector<8x32xf32> -> vector<8x32xf32>
    %c0_5 = arith.constant 0 : index
    %c0_6 = arith.constant 0 : index
    %4 = vector.load %arg4[%c0_5, %c0_6] : memref<1x32xf32, #tpu.memory_space<vmem>>, vector<1x32xf32>
    %5 = vector.broadcast %1 : vector<8x1xf32> to vector<8x32xf32>
    %6 = vector.broadcast %4 : vector<1x32xf32> to vector<8x32xf32>
    %7 = arith.mulf %5, %6 : vector<8x32xf32>
    %8 = arith.addf %3, %7 : vector<8x32xf32>
    %c0_7 = arith.constant 0 : index
    %c0_8 = arith.constant 0 : index
    %9 = vector.load %arg5[%c0_7, %c0_8] : memref<1x32xf32, #tpu.memory_space<vmem>>, vector<1x32xf32>
    %10 = vector.broadcast %9 : vector<1x32xf32> to vector<8x32xf32>
    %11 = arith.addf %8, %10 : vector<8x32xf32>
    %cst_9 = arith.constant 0.000000e+00 : f32
    %12 = vector.broadcast %cst_9 : f32 to vector<8x32xf32>
    %13 = arith.cmpf ogt, %11, %12 : vector<8x32xf32>
    %cst_10 = arith.constant 0.00999999977 : f32
    %14 = vector.broadcast %cst_10 : f32 to vector<8x32xf32>
    %15 = arith.mulf %14, %11 : vector<8x32xf32>
    %16 = arith.select %13, %11, %15 : vector<8x32xi1>, vector<8x32xf32>
    %c0_11 = arith.constant 0 : index
    %c0_12 = arith.constant 0 : index
    %17 = vector.load %arg6[%c0_11, %c0_12] : memref<32x32xf32, #tpu.memory_space<vmem>>, vector<32x32xf32>
    %cst_13 = arith.constant dense<0.000000e+00> : vector<8x32xf32>
    %18 = tpu.matmul %16, %17, %cst_13 {dimension_numbers = #tpu.dot_dimension_numbers<[1], [0], [0], [1], [0, 0, 1, 1], [], []>} : vector<8x32xf32>, vector<32x32xf32>, vector<8x32xf32> -> vector<8x32xf32>
    %c0_14 = arith.constant 0 : index
    %c0_15 = arith.constant 0 : index
    %19 = vector.load %arg7[%c0_14, %c0_15] : memref<1x32xf32, #tpu.memory_space<vmem>>, vector<1x32xf32>
    %20 = vector.broadcast %19 : vector<1x32xf32> to vector<8x32xf32>
    %21 = arith.addf %18, %20 : vector<8x32xf32>
    %cst_16 = arith.constant 0.000000e+00 : f32
    %22 = vector.broadcast %cst_16 : f32 to vector<8x32xf32>
    %23 = arith.cmpf ogt, %21, %22 : vector<8x32xf32>
    %cst_17 = arith.constant 0.00999999977 : f32
    %24 = vector.broadcast %cst_17 : f32 to vector<8x32xf32>
    %25 = arith.mulf %24, %21 : vector<8x32xf32>
    %26 = arith.select %23, %21, %25 : vector<8x32xi1>, vector<8x32xf32>
    %c0_18 = arith.constant 0 : index
    %c0_19 = arith.constant 0 : index
    %27 = vector.load %arg8[%c0_18, %c0_19] : memref<1x32xf32, #tpu.memory_space<vmem>>, vector<1x32xf32>
    %cst_20 = arith.constant dense<0.000000e+00> : vector<1x8xf32>
    %28 = tpu.matmul %27, %26, %cst_20 {dimension_numbers = #tpu.dot_dimension_numbers<[1], [1], [0], [0], [0, 0, 1, 0], [], []>} : vector<1x32xf32>, vector<8x32xf32>, vector<1x8xf32> -> vector<1x8xf32>
    %c0_21 = arith.constant 0 : index
    %c0_22 = arith.constant 0 : index
    %29 = vector.load %arg9[%c0_21, %c0_22] : memref<1x1xf32, #tpu.memory_space<vmem>>, vector<1x1xf32>
    %30 = vector.broadcast %29 : vector<1x1xf32> to vector<1x8xf32>
    %31 = arith.addf %28, %30 : vector<1x8xf32>
    %c0_23 = arith.constant 0 : index
    %c0_24 = arith.constant 0 : index
    %32 = vector.load %arg10[%c0_23, %c0_24] : memref<1x8xf32, #tpu.memory_space<vmem>>, vector<1x8xf32>
    tpu.vector_store %arg10[%c0_23, %c0_24], %31 {strides = array<i32>} : memref<1x8xf32, #tpu.memory_space<vmem>>, vector<1x8xf32>,
    return
  }
  func.func @transform_0(%arg0: i32) -> (i32, i32) {
    %c0_i32 = arith.constant 0 : i32
    %c0_i32_0 = arith.constant 0 : i32
    return %arg0, %c0_i32 : i32, i32
  }
  func.func @transform_1(%arg0: i32) -> (i32, i32) {
    %c0_i32 = arith.constant 0 : i32
    %c0_i32_0 = arith.constant 0 : i32
    return %arg0, %c0_i32 : i32, i32
  }
  func.func @transform_2(%arg0: i32) -> (i32, i32) {
    %c0_i32 = arith.constant 0 : i32
    %c0_i32_0 = arith.constant 0 : i32
    %c0_i32_1 = arith.constant 0 : i32
    return %c0_i32, %c0_i32_0 : i32, i32
  }
  func.func @transform_3(%arg0: i32) -> (i32, i32) {
    %c0_i32 = arith.constant 0 : i32
    %c0_i32_0 = arith.constant 0 : i32
    %c0_i32_1 = arith.constant 0 : i32
    return %c0_i32, %c0_i32_0 : i32, i32
  }
  func.func @transform_4(%arg0: i32) -> (i32, i32) {
    %c0_i32 = arith.constant 0 : i32
    %c0_i32_0 = arith.constant 0 : i32
    %c0_i32_1 = arith.constant 0 : i32
    return %c0_i32, %c0_i32_0 : i32, i32
  }
  func.func @transform_5(%arg0: i32) -> (i32, i32) {
    %c0_i32 = arith.constant 0 : i32
    %c0_i32_0 = arith.constant 0 : i32
    %c0_i32_1 = arith.constant 0 : i32
    return %c0_i32, %c0_i32_0 : i32, i32
  }
  func.func @transform_6(%arg0: i32) -> (i32, i32) {
    %c0_i32 = arith.constant 0 : i32
    %c0_i32_0 = arith.constant 0 : i32
    %c0_i32_1 = arith.constant 0 : i32
    return %c0_i32, %c0_i32_0 : i32, i32
  }
  func.func @transform_7(%arg0: i32) -> (i32, i32) {
    %c0_i32 = arith.constant 0 : i32
    %c0_i32_0 = arith.constant 0 : i32
    %c0_i32_1 = arith.constant 0 : i32
    return %c0_i32, %c0_i32_0 : i32, i32
  }
  func.func @transform_8(%arg0: i32) -> (i32, i32) {
    %c0_i32 = arith.constant 0 : i32
    %c0_i32_0 = arith.constant 0 : i32
    %c0_i32_1 = arith.constant 0 : i32
    return %c0_i32, %c0_i32_0 : i32, i32
  }
  func.func @transform_9(%arg0: i32) -> (i32, i32) {
    %c0_i32 = arith.constant 0 : i32
    %c0_i32_0 = arith.constant 0 : i32
    return %c0_i32, %arg0 : i32, i32
  }
}

</mosaic_0001>

<llo_original>
// kernel: tpu_custom_call.1
$region0: #{tpu_custom_call.1}
  #allocation0 [shape = 'u32[]', space=smem, size = 0x4, offset = 0x4, fixed_abs, tag = 'smem constant byte address 0x4 - core index']
  #allocation1 [shape = 'u32[72,128]{1,0:T(1,128)}', space=vmem, size = 0x9000, scoped, tag = 'internal scratch']
  #allocation2 [shape = 'f32[1,1]{1,0:T(1,128)S(1)}', space=vmem, size = 0x200, scoped, tag = 'scoped memory for tpu_custom_call.1']
  %s0 = inlined_call_operand.vmem [shape: f32[8,4], index: 0, kind: input, shape index: {}]
  %s1 = inlined_call_operand.vmem [shape: f32[8,1], index: 1, kind: input, shape index: {}]
  %s2 = inlined_call_operand.vmem [shape: f32[4,32], index: 2, kind: input, shape index: {}]
  %s3 = inlined_call_operand.vmem [shape: f32[1,32], index: 3, kind: input, shape index: {}]
  %s4 = inlined_call_operand.vmem [shape: f32[1,32], index: 4, kind: input, shape index: {}]
  %s5 = inlined_call_operand.hbm [shape: f32[32,32], index: 5, kind: input, shape index: {}]
  %s6 = inlined_call_operand.vmem [shape: f32[1,32], index: 6, kind: input, shape index: {}]
  %s7 = inlined_call_operand.vmem [shape: f32[1,32], index: 7, kind: input, shape index: {}]
  %s8 = inlined_call_operand.<no memory space> [shape: f32[1,1], index: 8, kind: input, shape index: {}]
  %s9 = inlined_call_operand.hbm [shape: f32[1,8], index: 9, kind: output, shape index: {}]
  %s10 = sld [smem:[#allocation0]]
  $region50: #{tpu_custom_call.1} parent=0
    _
  %s12 = ssub.s32 1, %s10
  %s13 = scalar_select 0, %s12, %s10
  %v14 = vstv %s8
  %15 = vst [vmem:[#allocation2] sm:$0x1] %v14
  $region1: #{tpu_custom_call.1} parent=0
    #allocation3 [shape = 'u8[16384]{0}', space=vmem, size = 0x4000, scoped, tag = 'input window, operand 5, single buffered']
    #allocation4 [shape = 's32[1]{0}', space=sflag, size = 0x4, scoped, tag = 'scoped memory for tpu_custom_call.1']
    #allocation5 [shape = 's32[1]{0}', space=sflag, size = 0x4, scoped, tag = 'scoped memory for tpu_custom_call.1']
    #allocation6 [shape = 'u8[512]{0}', space=vmem, size = 0x400, scoped, tag = 'output window, operand 0, single buffered']
    %16 = vsyncpa [#allocation4], 0
    %17 = vsyncpa [#allocation5], 0
    // Predicated region
    $region2: #{tpu_custom_call.1} parent=1 // pred_check
      _
    $region3: #{tpu_custom_call.1} parent=1 // pred_check_branch
      %19 = sbr.rel (0) target = $region5
    $region4: #{tpu_custom_call.1} parent=1 // pred_region
      _
    $region5: #{tpu_custom_call.1} parent=1 // pred_fallthru
      _
    // Predicated region
    $region6: #{tpu_custom_call.1} parent=1 // pred_check
      _
    $region7: #{tpu_custom_call.1} parent=1 // pred_check_branch
      %21 = sbr.rel (0) target = $region9
    $region8: #{tpu_custom_call.1} parent=1 // pred_region
      _
    $region9: #{tpu_custom_call.1} parent=1 // pred_fallthru
      _
    // Predicated region
    $region10: #{tpu_custom_call.1} parent=1 // pred_check
      _
    $region11: #{tpu_custom_call.1} parent=1 // pred_check_branch
      %23 = sbr.rel (0) target = $region13
    $region12: #{tpu_custom_call.1} parent=1 // pred_region
      _
    $region13: #{tpu_custom_call.1} parent=1 // pred_fallthru
      _
    // Predicated region
    $region14: #{tpu_custom_call.1} parent=1 // pred_check
      _
    $region15: #{tpu_custom_call.1} parent=1 // pred_check_branch
      %25 = sbr.rel (0) target = $region17
    $region16: #{tpu_custom_call.1} parent=1 // pred_region
      _
    $region17: #{tpu_custom_call.1} parent=1 // pred_fallthru
      _
    // Predicated region
    $region18: #{tpu_custom_call.1} parent=1 // pred_check
      _
    $region19: #{tpu_custom_call.1} parent=1 // pred_check_branch
      %27 = sbr.rel (0) target = $region21
    $region20: #{tpu_custom_call.1} parent=1 // pred_region
      _
    $region21: #{tpu_custom_call.1} parent=1 // pred_fallthru
      _
    // Predicated region
    $region22: #{tpu_custom_call.1} parent=1 // pred_check
      _
    $region23: #{tpu_custom_call.1} parent=1 // pred_check_branch
      %29 = sbr.rel (0) target = $region25
    $region24: #{tpu_custom_call.1} parent=1 // pred_region
      %31 = vsyncadd [#allocation4], 0
      %s32 = sshll.u32 %s5, 4
      %s33 = int_to_ptr.hbm [resolvable:$true] %s32
      %s34 = sshll.u32 [#allocation3], 4
      %s35 = int_to_ptr.vmem [resolvable:$true] %s34
      %40 = dma.hbm_to_vmem [thread:$0]  %s33, 512, %s35, [#allocation4], 128, 128, 8
    $region25: #{tpu_custom_call.1} parent=1 // pred_fallthru
      _
    // Predicated region
    $region26: #{tpu_custom_call.1} parent=1 // pred_check
      _
    $region27: #{tpu_custom_call.1} parent=1 // pred_check_branch
      %42 = sbr.rel (0) target = $region29
    $region28: #{tpu_custom_call.1} parent=1 // pred_region
      _
    $region29: #{tpu_custom_call.1} parent=1 // pred_fallthru
      _
    // Predicated region
    $region30: #{tpu_custom_call.1} parent=1 // pred_check
      _
    $region31: #{tpu_custom_call.1} parent=1 // pred_check_branch
      %44 = sbr.rel (0) target = $region33
    $region32: #{tpu_custom_call.1} parent=1 // pred_region
      _
    $region33: #{tpu_custom_call.1} parent=1 // pred_fallthru
      _
    // Predicated region
    $region34: #{tpu_custom_call.1} parent=1 // pred_check
      _
    $region35: #{tpu_custom_call.1} parent=1 // pred_check_branch
      %46 = sbr.rel (0) target = $region37
    $region36: #{tpu_custom_call.1} parent=1 // pred_region
      _
    $region37: #{tpu_custom_call.1} parent=1 // pred_fallthru
      _
    // Predicated region
    $region38: #{tpu_custom_call.1} parent=1 // pred_check
      _
    $region39: #{tpu_custom_call.1} parent=1 // pred_check_branch
      %48 = sbr.rel (0) target = $region41
    $region40: #{tpu_custom_call.1} parent=1 // pred_region
      %50 = dma.done [#allocation4], 512
    $region41: #{tpu_custom_call.1} parent=1 // pred_fallthru
      _
    %v51 = vld [vmem:[%s0] sm:$0xff]
    %v52 = vld [vmem:[%s1] sm:$0xff]
    %v53 = vld [vmem:[%s2] sm:$0xf]
    %v54 = vld [vmem:[%s3] sm:$0x1]
    %56 = vset.pattern.permute.xlu0 0
    %57 = vperm.xlu0 %56, %v52
    %v58 = vpop.permute.xlu0 %57
    %v61 = vperm.slane %v54, 0
    %v63 = vmul.f32 %v58, %v61
    %vm64 = vcmask 31744
    %v66 = vsel %vm64, %v51, 0
    %vm68 = vcmask 1043456
    %v70 = vsel %vm68, %v53, 0
    %72 = vmatpush.msra.mxu0 0.0
    %73 = vmatpush.msra.mxu0 0.0
    %74 = vmatpush.msra.mxu0 0.0
    %75 = vmatpush.msra.mxu0 0.0
    %76 = vmatpush.msra.mxu0 0.0
    %77 = vmatpush.msra.mxu0 0.0
    %78 = vmatpush.msra.mxu0 0.0
    %79 = vmatpush.msra.mxu0 0.0
    %80 = vmatpush.msra.mxu0 0.0
    %81 = vmatpush.msra.mxu0 0.0
    %82 = vmatpush.msra.mxu0 0.0
    %83 = vmatpush.msra.mxu0 0.0
    %84 = vmatpush.msra.mxu0 0.0
    %85 = vmatpush.msra.mxu0 0.0
    %86 = vmatpush.msra.mxu0 0.0
    %87 = vmatpush.msra.mxu0 %v70
    %88 = vmatmul.f32.gmra.mxu0 %v66
    %v89 = vpop.f32.mrf.mxu0
    %v90 = vadd.f32 %v63, %v89
    %91 = vdwg.mxu0
    %v92 = vld [vmem:[%s4] sm:$0x1]
    %v94 = vperm.slane %v92, 0
    %v96 = vadd.f32 %v90, %v94
    %vm97 = vcmp.gt.f32.partialorder %v96, 0.0
    %v98 = vmul.f32 %v96, 0.01
    %v99 = vsel %vm97, %v96, %v98
    %v100 = vld [vmem:[#allocation3] sm:$0xff]
    %v101 = vld [vmem:[#allocation3 + $0x8] sm:$0xff]
    %v102 = vld [vmem:[#allocation3 + $0x10] sm:$0xff]
    %v103 = vld [vmem:[#allocation3 + $0x18] sm:$0xff]
    %v104 = vld [vmem:[%s6] sm:$0x1]
    %v106 = vperm.slane %v104, 0
    %vm108 = vcmask 261120
    %v110 = vsel %vm108, %v99, 0
    %112 = vmatpush.msra.mxu0 0.0
    %113 = vmatpush.msra.mxu0 0.0
    %114 = vmatpush.msra.mxu0 0.0
    %115 = vmatpush.msra.mxu0 0.0
    %116 = vmatpush.msra.mxu0 0.0
    %117 = vmatpush.msra.mxu0 0.0
    %118 = vmatpush.msra.mxu0 0.0
    %119 = vmatpush.msra.mxu0 0.0
    %120 = vmatpush.msra.mxu0 0.0
    %121 = vmatpush.msra.mxu0 0.0
    %122 = vmatpush.msra.mxu0 0.0
    %123 = vmatpush.msra.mxu0 0.0
    %124 = vmatpush.msra.mxu0 %v103
    %125 = vmatpush.msra.mxu0 %v102
    %126 = vmatpush.msra.mxu0 %v101
    %127 = vmatpush.msra.mxu0 %v100
    %128 = vmatmul.f32.gmra.mxu0 %v110
    %v129 = vpop.f32.mrf.mxu0
    %v130 = vadd.f32 %v106, %v129
    %131 = vdwg.mxu0
    %vm132 = vcmp.gt.f32.partialorder %v130, 0.0
    %v133 = vmul.f32 %v130, 0.01
    %v134 = vsel %vm132, %v130, %v133
    %v135 = vld [vmem:[%s7] sm:$0x1]
    %v136 = vld [vmem:[#allocation2] sm:$0x1]
    %138 = vset.pattern.permute.xlu0 0
    %139 = vperm.xlu0 %138, %v136
    %v140 = vpop.permute.xlu0 %139
    %v142 = vperm.slane %v140, 0
    %v144 = vsel %vm108, %v135, 0
    %v147 = vsel %vm108, %v134, 0
    %149 = vmatpush.xpose.msra.mxu0 0.0
    %150 = vmatpush.xpose.msra.mxu0 0.0
    %151 = vmatpush.xpose.msra.mxu0 0.0
    %152 = vmatpush.xpose.msra.mxu0 0.0
    %153 = vmatpush.xpose.msra.mxu0 0.0
    %154 = vmatpush.xpose.msra.mxu0 0.0
    %155 = vmatpush.xpose.msra.mxu0 0.0
    %156 = vmatpush.xpose.msra.mxu0 0.0
    %157 = vmatpush.xpose.msra.mxu0 0.0
    %158 = vmatpush.xpose.msra.mxu0 0.0
    %159 = vmatpush.xpose.msra.mxu0 0.0
    %160 = vmatpush.xpose.msra.mxu0 0.0
    %161 = vmatpush.xpose.msra.mxu0 0.0
    %162 = vmatpush.xpose.msra.mxu0 0.0
    %163 = vmatpush.xpose.msra.mxu0 0.0
    %164 = vmatpush.xpose.msra.mxu0 %v147
    %165 = vmatmul.f32.gmra.mxu0 %v144
    %v166 = vpop.f32.mrf.mxu0
    %v167 = vadd.f32 %v142, %v166
    %168 = vdwg.mxu0
    %vm169 = vcmask 57344
    %170 = vst.msk [vmem:[#allocation6] sm:$0x1] %vm169, %v167
    // Predicated region
    $region42: #{tpu_custom_call.1} parent=1 // pred_check
      _
    $region43: #{tpu_custom_call.1} parent=1 // pred_check_branch
      %172 = sbr.rel (0) target = $region45
    $region44: #{tpu_custom_call.1} parent=1 // pred_region
      %174 = vsyncadd [#allocation5], 0
      %s176 = sshll.u32 [#allocation6], 4
      %s177 = int_to_ptr.vmem [resolvable:$true] %s176
      %s178 = sshll.u32 %s9, 4
      %s179 = int_to_ptr.hbm [resolvable:$true] %s178
      %181 = dma.vmem_to_hbm [thread:$0]  %s177, 16, %s179, [#allocation5]
    $region45: #{tpu_custom_call.1} parent=1 // pred_fallthru
      _
    // Predicated region
    $region46: #{tpu_custom_call.1} parent=1 // pred_check
      _
    $region47: #{tpu_custom_call.1} parent=1 // pred_check_branch
      %183 = sbr.rel (0) target = $region49
    $region48: #{tpu_custom_call.1} parent=1 // pred_region
      %185 = dma.done [#allocation5], 16
    $region49: #{tpu_custom_call.1} parent=1 // pred_fallthru
      _
    %186 = vsyncpa [#allocation4], 1
    %187 = vsyncpa [#allocation5], 1

</llo_original>
